<compile_context>
chip_gen: v7x
topology: tpu7x:2x2x1
jax: 0.10.0
libtpu: 0.0.40
codegen_flags: <defaults>
</compile_context>

<pallas_src>
import jax
import jax.numpy as jnp
from jax import lax
from jax.experimental import pallas as pl
from jax.experimental.pallas import tpu as pltpu


def _matmul_bt_kernel(a_ref, b_ref, o_ref):
    # a_ref: (tm, K) tile of x1[0]
    # b_ref: (tn, K) tile of x2[0]   (rows of x2 == rows of x2^T's columns)
    # o_ref: (tm, tn) output tile
    o_ref[...] = lax.dot_general(
        a_ref[...], b_ref[...],
        dimension_numbers=(((1,), (1,)), ((), ())),   # contract last axes: A @ B^T
        preferred_element_type=jnp.float32,
    ).astype(o_ref.dtype)


def _num_tensorcores():
    """Best-effort detection of TensorCores per chip (2 on v7x, else 1)."""
    try:
        kind = jax.devices()[0].device_kind.lower()
        if "v7" in kind:
            return 2
    except Exception:
        pass
    return 1


def matmul_bt(x1, x2, *, tm=None, tn=None):
    """Pallas implementation of jnp.matmul(x1, swapaxes(x2, -1, -2)).

    x1: (1, M, K), x2: (1, N, K)  ->  out: (1, M, N)
    """
    assert x1.shape[0] == 1 and x2.shape[0] == 1, "demo supports B=1 (matches spec)"
    a = x1[0]   # (M, K)
    b = x2[0]   # (N, K) — already the row layout of x2^T; NO transpose needed
    M, K = a.shape
    N, Kb = b.shape
    assert K == Kb, f"contraction dims must match: {K} vs {Kb}"

    if tm is None:
        tm = M                      # whole M in one tile (fits VMEM at these sizes)
    if tn is None:
        # v7x: split N across the two TensorCores ("parallel" grid axis).
        # v5e/v6e (single TC): one grid step — no per-step overhead, 256-wide
        # unmasked lane-dense output store.
        if _num_tensorcores() >= 2 and N % 256 == 0:
            tn = N // 2
        else:
            tn = N
    assert M % tm == 0 and N % tn == 0
    # TODO(synk): for K >> 64 or M/N in the thousands, add K as a trailing
    # "arbitrary" grid axis with a VMEM f32 accumulator (P3 pattern).

    itemsize = jnp.dtype(x1.dtype).itemsize
    cost = pl.CostEstimate(
        flops=2 * M * N * K,
        transcendentals=0,
        bytes_accessed=(M * K + N * K + M * N) * itemsize,
    )

    out = pl.pallas_call(
        _matmul_bt_kernel,
        out_shape=jax.ShapeDtypeStruct((M, N), x1.dtype),
        grid_spec=pltpu.PrefetchScalarGridSpec(
            num_scalar_prefetch=0,
            grid=(M // tm, N // tn),
            in_specs=[
                pl.BlockSpec((tm, K), lambda i, j: (i, 0)),
                pl.BlockSpec((tn, K), lambda i, j: (j, 0)),
            ],
            out_specs=pl.BlockSpec((tm, tn), lambda i, j: (i, j)),
        ),
        compiler_params=pltpu.CompilerParams(
            dimension_semantics=("parallel", "parallel"),
        ),
        cost_estimate=cost,
    )(a, b)
    return out[None, ...]   # restore batch dim -> (1, M, N)


if __name__ == "__main__":
    key = jax.random.PRNGKey(0)
    k1, k2 = jax.random.split(key)

    # Small shapes consistent with the forward: x1 (B, M, K), x2 (B, N, K)
    B, M, N, K = 1, 256, 256, 64
    x1 = jax.random.normal(k1, (B, M, K), dtype=jnp.float32)
    x2 = jax.random.normal(k2, (B, N, K), dtype=jnp.float32)

    out = matmul_bt(x1, x2)
    jax.block_until_ready(out)

    # Reference: same semantics as torch.matmul(x1, x2.transpose(-2, -1))
    ref = jnp.matmul(x1, jnp.swapaxes(x2, -1, -2),
                     precision=lax.Precision.HIGHEST)
    assert out.shape == (B, M, N), out.shape
    assert jnp.allclose(out, ref, atol=1e-3, rtol=1e-3), \
        float(jnp.max(jnp.abs(out - ref)))

    print("KERNEL_OK")
</pallas_src>

<mosaic_0001>
module attributes {stable_mosaic.version = 11 : i64} {
  func.func @_matmul_bt_kernel(%arg0: i32, %arg1: i32, %arg2: memref<256x64xf32, #tpu.memory_space<vmem>>, %arg3: memref<256x64xf32, #tpu.memory_space<vmem>>, %arg4: memref<256x256xf32, #tpu.memory_space<vmem>>) attributes {dimension_semantics = [#tpu.dimension_semantics<parallel>, #tpu.dimension_semantics<parallel>], iteration_bounds = array<i64: 1, 1>, scalar_prefetch = 0 : i64, scratch_operands = 0 : i64, tpu.core_type = #tpu.core_type<tc>, window_params = [{transform_indices = @transform_0, window_bounds = array<i64: 256, 64>}, {transform_indices = @transform_1, window_bounds = array<i64: 256, 64>}, {transform_indices = @transform_2, window_bounds = array<i64: 256, 256>}]} {
    %c0 = arith.constant 0 : index
    %c0_0 = arith.constant 0 : index
    %0 = vector.load %arg2[%c0, %c0_0] : memref<256x64xf32, #tpu.memory_space<vmem>>, vector<256x64xf32>
    %c0_1 = arith.constant 0 : index
    %c0_2 = arith.constant 0 : index
    %1 = vector.load %arg3[%c0_1, %c0_2] : memref<256x64xf32, #tpu.memory_space<vmem>>, vector<256x64xf32>
    %cst = arith.constant dense<0.000000e+00> : vector<256x256xf32>
    %2 = tpu.matmul %0, %1, %cst {dimension_numbers = #tpu.dot_dimension_numbers<[1], [1], [0], [0], [0, 0, 1, 0], [], []>} : vector<256x64xf32>, vector<256x64xf32>, vector<256x256xf32> -> vector<256x256xf32>
    %c0_3 = arith.constant 0 : index
    %c0_4 = arith.constant 0 : index
    %3 = vector.load %arg4[%c0_3, %c0_4] : memref<256x256xf32, #tpu.memory_space<vmem>>, vector<256x256xf32>
    tpu.vector_store %arg4[%c0_3, %c0_4], %2 {strides = array<i32>} : memref<256x256xf32, #tpu.memory_space<vmem>>, vector<256x256xf32>,
    return
  }
  func.func @transform_0(%arg0: i32, %arg1: i32) -> (i32, i32) {
    %c0_i32 = arith.constant 0 : i32
    %c0_i32_0 = arith.constant 0 : i32
    return %arg0, %c0_i32 : i32, i32
  }
  func.func @transform_1(%arg0: i32, %arg1: i32) -> (i32, i32) {
    %c0_i32 = arith.constant 0 : i32
    %c0_i32_0 = arith.constant 0 : i32
    return %arg1, %c0_i32 : i32, i32
  }
  func.func @transform_2(%arg0: i32, %arg1: i32) -> (i32, i32) {
    %c0_i32 = arith.constant 0 : i32
    return %arg0, %arg1 : i32, i32
  }
}

</mosaic_0001>

<llo_original>
// kernel: tpu_custom_call.1
$region0: #{tpu_custom_call.1}
  #allocation0 [shape = 'u32[]', space=smem, size = 0x4, offset = 0x4, fixed_abs, tag = 'smem constant byte address 0x4 - core index']
  #allocation1 [shape = 'u32[144,128]{1,0:T(1,128)}', space=vmem, size = 0x12000, scoped, tag = 'internal scratch']
  %s0 = inlined_call_operand.vmem [shape: f32[256,64], index: 0, kind: input, shape index: {}]
  %s1 = inlined_call_operand.vmem [shape: f32[256,64], index: 1, kind: input, shape index: {}]
  %s2 = inlined_call_operand.hbm [shape: f32[256,256], index: 2, kind: output, shape index: {}]
  %s3 = sld [smem:[#allocation0]]
  $region18: #{tpu_custom_call.1} parent=0
    _
  %s5 = ssub.s32 1, %s3
  %s6 = scalar_select 0, %s5, %s3
  $region1: #{tpu_custom_call.1} parent=0
    #allocation2 [shape = 'u8[262144]{0}', space=vmem, size = 0x40000, scoped, tag = 'output window, operand 0, single buffered']
    #allocation3 [shape = 's32[1]{0}', space=sflag, size = 0x4, scoped, tag = 'scoped memory for tpu_custom_call.1']
    %7 = vsyncpa [#allocation3], 0
    // Predicated region
    $region2: #{tpu_custom_call.1} parent=1 // pred_check
      _
    $region3: #{tpu_custom_call.1} parent=1 // pred_check_branch
      %9 = sbr.rel (0) target = $region5
    $region4: #{tpu_custom_call.1} parent=1 // pred_region
      _
    $region5: #{tpu_custom_call.1} parent=1 // pred_fallthru
      _
    // Predicated region
    $region6: #{tpu_custom_call.1} parent=1 // pred_check
      _
    $region7: #{tpu_custom_call.1} parent=1 // pred_check_branch
      %11 = sbr.rel (0) target = $region9
    $region8: #{tpu_custom_call.1} parent=1 // pred_region
      _
    $region9: #{tpu_custom_call.1} parent=1 // pred_fallthru
      _
    %v12 = vld [vmem:[%s0] sm:$0xff]
    %v13 = vld [vmem:[%s0 + $0x8] sm:$0xff]
    %v14 = vld [vmem:[%s0 + $0x10] sm:$0xff]
    %v15 = vld [vmem:[%s0 + $0x18] sm:$0xff]
    %v16 = vld [vmem:[%s0 + $0x20] sm:$0xff]
    %v17 = vld [vmem:[%s0 + $0x28] sm:$0xff]
    %v18 = vld [vmem:[%s0 + $0x30] sm:$0xff]
    %v19 = vld [vmem:[%s0 + $0x38] sm:$0xff]
    %v20 = vld [vmem:[%s0 + $0x40] sm:$0xff]
    %v21 = vld [vmem:[%s0 + $0x48] sm:$0xff]
    %v22 = vld [vmem:[%s0 + $0x50] sm:$0xff]
    %v23 = vld [vmem:[%s0 + $0x58] sm:$0xff]
    %v24 = vld [vmem:[%s0 + $0x60] sm:$0xff]
    %v25 = vld [vmem:[%s0 + $0x68] sm:$0xff]
    %v26 = vld [vmem:[%s0 + $0x70] sm:$0xff]
    %v27 = vld [vmem:[%s0 + $0x78] sm:$0xff]
    %v28 = vld [vmem:[%s0 + $0x80] sm:$0xff]
    %v29 = vld [vmem:[%s0 + $0x88] sm:$0xff]
    %v30 = vld [vmem:[%s0 + $0x90] sm:$0xff]
    %v31 = vld [vmem:[%s0 + $0x98] sm:$0xff]
    %v32 = vld [vmem:[%s0 + $0xa0] sm:$0xff]
    %v33 = vld [vmem:[%s0 + $0xa8] sm:$0xff]
    %v34 = vld [vmem:[%s0 + $0xb0] sm:$0xff]
    %v35 = vld [vmem:[%s0 + $0xb8] sm:$0xff]
    %v36 = vld [vmem:[%s0 + $0xc0] sm:$0xff]
    %v37 = vld [vmem:[%s0 + $0xc8] sm:$0xff]
    %v38 = vld [vmem:[%s0 + $0xd0] sm:$0xff]
    %v39 = vld [vmem:[%s0 + $0xd8] sm:$0xff]
    %v40 = vld [vmem:[%s0 + $0xe0] sm:$0xff]
    %v41 = vld [vmem:[%s0 + $0xe8] sm:$0xff]
    %v42 = vld [vmem:[%s0 + $0xf0] sm:$0xff]
    %v43 = vld [vmem:[%s0 + $0xf8] sm:$0xff]
    %v44 = vld [vmem:[%s1] sm:$0xff]
    %v45 = vld [vmem:[%s1 + $0x8] sm:$0xff]
    %v46 = vld [vmem:[%s1 + $0x10] sm:$0xff]
    %v47 = vld [vmem:[%s1 + $0x18] sm:$0xff]
    %v48 = vld [vmem:[%s1 + $0x20] sm:$0xff]
    %v49 = vld [vmem:[%s1 + $0x28] sm:$0xff]
    %v50 = vld [vmem:[%s1 + $0x30] sm:$0xff]
    %v51 = vld [vmem:[%s1 + $0x38] sm:$0xff]
    %v52 = vld [vmem:[%s1 + $0x40] sm:$0xff]
    %v53 = vld [vmem:[%s1 + $0x48] sm:$0xff]
    %v54 = vld [vmem:[%s1 + $0x50] sm:$0xff]
    %v55 = vld [vmem:[%s1 + $0x58] sm:$0xff]
    %v56 = vld [vmem:[%s1 + $0x60] sm:$0xff]
    %v57 = vld [vmem:[%s1 + $0x68] sm:$0xff]
    %v58 = vld [vmem:[%s1 + $0x70] sm:$0xff]
    %v59 = vld [vmem:[%s1 + $0x78] sm:$0xff]
    %v60 = vld [vmem:[%s1 + $0x80] sm:$0xff]
    %v61 = vld [vmem:[%s1 + $0x88] sm:$0xff]
    %v62 = vld [vmem:[%s1 + $0x90] sm:$0xff]
    %v63 = vld [vmem:[%s1 + $0x98] sm:$0xff]
    %v64 = vld [vmem:[%s1 + $0xa0] sm:$0xff]
    %v65 = vld [vmem:[%s1 + $0xa8] sm:$0xff]
    %v66 = vld [vmem:[%s1 + $0xb0] sm:$0xff]
    %v67 = vld [vmem:[%s1 + $0xb8] sm:$0xff]
    %v68 = vld [vmem:[%s1 + $0xc0] sm:$0xff]
    %v69 = vld [vmem:[%s1 + $0xc8] sm:$0xff]
    %v70 = vld [vmem:[%s1 + $0xd0] sm:$0xff]
    %v71 = vld [vmem:[%s1 + $0xd8] sm:$0xff]
    %v72 = vld [vmem:[%s1 + $0xe0] sm:$0xff]
    %v73 = vld [vmem:[%s1 + $0xe8] sm:$0xff]
    %v74 = vld [vmem:[%s1 + $0xf0] sm:$0xff]
    %v75 = vld [vmem:[%s1 + $0xf8] sm:$0xff]
    %vm76 = vcmask 523264
    %v78 = vsel %vm76, %v12, 0
    %v81 = vsel %vm76, %v13, 0
    %v84 = vsel %vm76, %v14, 0
    %v87 = vsel %vm76, %v15, 0
    %v90 = vsel %vm76, %v16, 0
    %v93 = vsel %vm76, %v17, 0
    %v96 = vsel %vm76, %v18, 0
    %v99 = vsel %vm76, %v19, 0
    %v102 = vsel %vm76, %v20, 0
    %v105 = vsel %vm76, %v21, 0
    %v108 = vsel %vm76, %v22, 0
    %v111 = vsel %vm76, %v23, 0
    %v114 = vsel %vm76, %v24, 0
    %v117 = vsel %vm76, %v25, 0
    %v120 = vsel %vm76, %v26, 0
    %v123 = vsel %vm76, %v27, 0
    %v126 = vsel %vm76, %v28, 0
    %v129 = vsel %vm76, %v29, 0
    %v132 = vsel %vm76, %v30, 0
    %v135 = vsel %vm76, %v31, 0
    %v138 = vsel %vm76, %v32, 0
    %v141 = vsel %vm76, %v33, 0
    %v144 = vsel %vm76, %v34, 0
    %v147 = vsel %vm76, %v35, 0
    %v150 = vsel %vm76, %v36, 0
    %v153 = vsel %vm76, %v37, 0
    %v156 = vsel %vm76, %v38, 0
    %v159 = vsel %vm76, %v39, 0
    %v162 = vsel %vm76, %v40, 0
    %v165 = vsel %vm76, %v41, 0
    %v168 = vsel %vm76, %v42, 0
    %v171 = vsel %vm76, %v43, 0
    %v174 = vsel %vm76, %v44, 0
    %v177 = vsel %vm76, %v45, 0
    %v180 = vsel %vm76, %v46, 0
    %v183 = vsel %vm76, %v47, 0
    %v186 = vsel %vm76, %v48, 0
    %v189 = vsel %vm76, %v49, 0
    %v192 = vsel %vm76, %v50, 0
    %v195 = vsel %vm76, %v51, 0
    %v198 = vsel %vm76, %v52, 0
    %v201 = vsel %vm76, %v53, 0
    %v204 = vsel %vm76, %v54, 0
    %v207 = vsel %vm76, %v55, 0
    %v210 = vsel %vm76, %v56, 0
    %v213 = vsel %vm76, %v57, 0
    %v216 = vsel %vm76, %v58, 0
    %v219 = vsel %vm76, %v59, 0
    %v222 = vsel %vm76, %v60, 0
    %v225 = vsel %vm76, %v61, 0
    %v228 = vsel %vm76, %v62, 0
    %v231 = vsel %vm76, %v63, 0
    %v234 = vsel %vm76, %v64, 0
    %v237 = vsel %vm76, %v65, 0
    %v240 = vsel %vm76, %v66, 0
    %v243 = vsel %vm76, %v67, 0
    %v246 = vsel %vm76, %v68, 0
    %v249 = vsel %vm76, %v69, 0
    %v252 = vsel %vm76, %v70, 0
    %v255 = vsel %vm76, %v71, 0
    %v258 = vsel %vm76, %v72, 0
    %v261 = vsel %vm76, %v73, 0
    %v264 = vsel %vm76, %v74, 0
    %v267 = vsel %vm76, %v75, 0
    %269 = vmatprep.subr.mxu0 0.0
    %270 = vmatpush1.xpose.msra.mxu0 %v174
    %271 = vmatprep.subr.mxu0 0.0
    %272 = vmatpush1.xpose.msra.mxu0 %v177
    %273 = vmatprep.subr.mxu0 0.0
    %274 = vmatpush1.xpose.msra.mxu0 %v180
    %275 = vmatprep.subr.mxu0 0.0
    %276 = vmatpush1.xpose.msra.mxu0 %v183
    %277 = vmatprep.subr.mxu0 0.0
    %278 = vmatpush1.xpose.msra.mxu0 %v186
    %279 = vmatprep.subr.mxu0 0.0
    %280 = vmatpush1.xpose.msra.mxu0 %v189
    %281 = vmatprep.subr.mxu0 0.0
    %282 = vmatpush1.xpose.msra.mxu0 %v192
    %283 = vmatprep.subr.mxu0 0.0
    %284 = vmatpush1.xpose.msra.mxu0 %v195
    %285 = vmatprep.subr.mxu0 0.0
    %286 = vmatpush1.xpose.msra.mxu0 %v198
    %287 = vmatprep.subr.mxu0 0.0
    %288 = vmatpush1.xpose.msra.mxu0 %v201
    %289 = vmatprep.subr.mxu0 0.0
    %290 = vmatpush1.xpose.msra.mxu0 %v204
    %291 = vmatprep.subr.mxu0 0.0
    %292 = vmatpush1.xpose.msra.mxu0 %v207
    %293 = vmatprep.subr.mxu0 0.0
    %294 = vmatpush1.xpose.msra.mxu0 %v210
    %295 = vmatprep.subr.mxu0 0.0
    %296 = vmatpush1.xpose.msra.mxu0 %v213
    %297 = vmatprep.subr.mxu0 0.0
    %298 = vmatpush1.xpose.msra.mxu0 %v216
    %299 = vmatprep.subr.mxu0 0.0
    %300 = vmatpush1.xpose.msra.mxu0 %v219
    %301 = vmatprep.subr.mxu0 0.0
    %302 = vmatpush1.xpose.msra.mxu0 %v222
    %303 = vmatprep.subr.mxu0 0.0
    %304 = vmatpush1.xpose.msra.mxu0 %v225
    %305 = vmatprep.subr.mxu0 0.0
    %306 = vmatpush1.xpose.msra.mxu0 %v228
    %307 = vmatprep.subr.mxu0 0.0
    %308 = vmatpush1.xpose.msra.mxu0 %v231
    %309 = vmatprep.subr.mxu0 0.0
    %310 = vmatpush1.xpose.msra.mxu0 %v234
    %311 = vmatprep.subr.mxu0 0.0
    %312 = vmatpush1.xpose.msra.mxu0 %v237
    %313 = vmatprep.subr.mxu0 0.0
    %314 = vmatpush1.xpose.msra.mxu0 %v240
    %315 = vmatprep.subr.mxu0 0.0
    %316 = vmatpush1.xpose.msra.mxu0 %v243
    %317 = vmatprep.subr.mxu0 0.0
    %318 = vmatpush1.xpose.msra.mxu0 %v246
    %319 = vmatprep.subr.mxu0 0.0
    %320 = vmatpush1.xpose.msra.mxu0 %v249
    %321 = vmatprep.subr.mxu0 0.0
    %322 = vmatpush1.xpose.msra.mxu0 %v252
    %323 = vmatprep.subr.mxu0 0.0
    %324 = vmatpush1.xpose.msra.mxu0 %v255
    %325 = vmatprep.subr.mxu0 0.0
    %326 = vmatpush1.xpose.msra.mxu0 %v258
    %327 = vmatprep.subr.mxu0 0.0
    %328 = vmatpush1.xpose.msra.mxu0 %v261
    %329 = vmatprep.subr.mxu0 0.0
    %330 = vmatpush1.xpose.msra.mxu0 %v264
    %331 = vmatprep.subr.mxu0 0.0
    %332 = vmatpush1.xpose.msra.mxu0 %v267
    %333 = vmatprep.mubr.f32.mxu0 0.0
    %334 = vmatmul.mubr.f32.gmra.mrb[0].mxu0 %v78
    %v335 = vpop.f32.mrb[0].mxu0
    %v336 = vadd.f32 0.0, %v335
    %v337 = vpop.f32.mrb[0].mxu0
    %v338 = vadd.f32 0.0, %v337
    %339 = vmatprep.mubr.f32.mxu0 0.0
    %340 = vmatmul.mubr.f32.gmra.mrb[0].mxu0 %v81
    %v341 = vpop.f32.mrb[0].mxu0
    %v342 = vadd.f32 0.0, %v341
    %v343 = vpop.f32.mrb[0].mxu0
    %v344 = vadd.f32 0.0, %v343
    %345 = vmatprep.mubr.f32.mxu0 0.0
    %346 = vmatmul.mubr.f32.gmra.mrb[0].mxu0 %v84
    %v347 = vpop.f32.mrb[0].mxu0
    %v348 = vadd.f32 0.0, %v347
    %v349 = vpop.f32.mrb[0].mxu0
    %v350 = vadd.f32 0.0, %v349
    %351 = vmatprep.mubr.f32.mxu0 0.0
    %352 = vmatmul.mubr.f32.gmra.mrb[0].mxu0 %v87
    %v353 = vpop.f32.mrb[0].mxu0
    %v354 = vadd.f32 0.0, %v353
    %v355 = vpop.f32.mrb[0].mxu0
    %v356 = vadd.f32 0.0, %v355
    %357 = vmatprep.mubr.f32.mxu0 0.0
    %358 = vmatmul.mubr.f32.gmra.mrb[0].mxu0 %v90
    %v359 = vpop.f32.mrb[0].mxu0
    %v360 = vadd.f32 0.0, %v359
    %v361 = vpop.f32.mrb[0].mxu0
    %v362 = vadd.f32 0.0, %v361
    %363 = vmatprep.mubr.f32.mxu0 0.0
    %364 = vmatmul.mubr.f32.gmra.mrb[0].mxu0 %v93
    %v365 = vpop.f32.mrb[0].mxu0
    %v366 = vadd.f32 0.0, %v365
    %v367 = vpop.f32.mrb[0].mxu0
    %v368 = vadd.f32 0.0, %v367
    %369 = vmatprep.mubr.f32.mxu0 0.0
    %370 = vmatmul.mubr.f32.gmra.mrb[0].mxu0 %v96
    %v371 = vpop.f32.mrb[0].mxu0
    %v372 = vadd.f32 0.0, %v371
    %v373 = vpop.f32.mrb[0].mxu0
    %v374 = vadd.f32 0.0, %v373
    %375 = vmatprep.mubr.f32.mxu0 0.0
    %376 = vmatmul.mubr.f32.gmra.mrb[0].mxu0 %v99
    %v377 = vpop.f32.mrb[0].mxu0
    %v378 = vadd.f32 0.0, %v377
    %v379 = vpop.f32.mrb[0].mxu0
    %v380 = vadd.f32 0.0, %v379
    %381 = vmatprep.mubr.f32.mxu0 0.0
    %382 = vmatmul.mubr.f32.gmra.mrb[0].mxu0 %v102
    %v383 = vpop.f32.mrb[0].mxu0
    %v384 = vadd.f32 0.0, %v383
    %v385 = vpop.f32.mrb[0].mxu0
    %v386 = vadd.f32 0.0, %v385
    %387 = vmatprep.mubr.f32.mxu0 0.0
    %388 = vmatmul.mubr.f32.gmra.mrb[0].mxu0 %v105
    %v389 = vpop.f32.mrb[0].mxu0
    %v390 = vadd.f32 0.0, %v389
    %v391 = vpop.f32.mrb[0].mxu0
    %v392 = vadd.f32 0.0, %v391
    %393 = vmatprep.mubr.f32.mxu0 0.0
    %394 = vmatmul.mubr.f32.gmra.mrb[0].mxu0 %v108
    %v395 = vpop.f32.mrb[0].mxu0
    %v396 = vadd.f32 0.0, %v395
    %v397 = vpop.f32.mrb[0].mxu0
    %v398 = vadd.f32 0.0, %v397
    %399 = vmatprep.mubr.f32.mxu0 0.0
    %400 = vmatmul.mubr.f32.gmra.mrb[0].mxu0 %v111
    %v401 = vpop.f32.mrb[0].mxu0
    %v402 = vadd.f32 0.0, %v401
    %v403 = vpop.f32.mrb[0].mxu0
    %v404 = vadd.f32 0.0, %v403
    %405 = vmatprep.mubr.f32.mxu0 0.0
    %406 = vmatmul.mubr.f32.gmra.mrb[0].mxu0 %v114
    %v407 = vpop.f32.mrb[0].mxu0
    %v408 = vadd.f32 0.0, %v407
    %v409 = vpop.f32.mrb[0].mxu0
    %v410 = vadd.f32 0.0, %v409
    %411 = vmatprep.mubr.f32.mxu0 0.0
    %412 = vmatmul.mubr.f32.gmra.mrb[0].mxu0 %v117
    %v413 = vpop.f32.mrb[0].mxu0
    %v414 = vadd.f32 0.0, %v413
    %v415 = vpop.f32.mrb[0].mxu0
    %v416 = vadd.f32 0.0, %v415
    %417 = vmatprep.mubr.f32.mxu0 0.0
    %418 = vmatmul.mubr.f32.gmra.mrb[0].mxu0 %v120
    %v419 = vpop.f32.mrb[0].mxu0
    %v420 = vadd.f32 0.0, %v419
    %v421 = vpop.f32.mrb[0].mxu0
    %v422 = vadd.f32 0.0, %v421
    %423 = vmatprep.mubr.f32.mxu0 0.0
    %424 = vmatmul.mubr.f32.gmra.mrb[0].mxu0 %v123
    %v425 = vpop.f32.mrb[0].mxu0
    %v426 = vadd.f32 0.0, %v425
    %v427 = vpop.f32.mrb[0].mxu0
    %v428 = vadd.f32 0.0, %v427
    %429 = vmatprep.mubr.f32.mxu0 0.0
    %430 = vmatmul.mubr.f32.gmra.mrb[0].mxu0 %v126
    %v431 = vpop.f32.mrb[0].mxu0
    %v432 = vadd.f32 0.0, %v431
    %v433 = vpop.f32.mrb[0].mxu0
    %v434 = vadd.f32 0.0, %v433
    %435 = vmatprep.mubr.f32.mxu0 0.0
    %436 = vmatmul.mubr.f32.gmra.mrb[0].mxu0 %v129
    %v437 = vpop.f32.mrb[0].mxu0
    %v438 = vadd.f32 0.0, %v437
    %v439 = vpop.f32.mrb[0].mxu0
    %v440 = vadd.f32 0.0, %v439
    %441 = vmatprep.mubr.f32.mxu0 0.0
    %442 = vmatmul.mubr.f32.gmra.mrb[0].mxu0 %v132
    %v443 = vpop.f32.mrb[0].mxu0
    %v444 = vadd.f32 0.0, %v443
    %v445 = vpop.f32.mrb[0].mxu0
    %v446 = vadd.f32 0.0, %v445
    %447 = vmatprep.mubr.f32.mxu0 0.0
    %448 = vmatmul.mubr.f32.gmra.mrb[0].mxu0 %v135
    %v449 = vpop.f32.mrb[0].mxu0
    %v450 = vadd.f32 0.0, %v449
    %v451 = vpop.f32.mrb[0].mxu0
    %v452 = vadd.f32 0.0, %v451
    %453 = vmatprep.mubr.f32.mxu0 0.0
    %454 = vmatmul.mubr.f32.gmra.mrb[0].mxu0 %v138
    %v455 = vpop.f32.mrb[0].mxu0
    %v456 = vadd.f32 0.0, %v455
    %v457 = vpop.f32.mrb[0].mxu0
    %v458 = vadd.f32 0.0, %v457
    %459 = vmatprep.mubr.f32.mxu0 0.0
    %460 = vmatmul.mubr.f32.gmra.mrb[0].mxu0 %v141
    %v461 = vpop.f32.mrb[0].mxu0
    %v462 = vadd.f32 0.0, %v461
    %v463 = vpop.f32.mrb[0].mxu0
    %v464 = vadd.f32 0.0, %v463
    %465 = vmatprep.mubr.f32.mxu0 0.0
    %466 = vmatmul.mubr.f32.gmra.mrb[0].mxu0 %v144
    %v467 = vpop.f32.mrb[0].mxu0
    %v468 = vadd.f32 0.0, %v467
    %v469 = vpop.f32.mrb[0].mxu0
    %v470 = vadd.f32 0.0, %v469
    %471 = vmatprep.mubr.f32.mxu0 0.0
    %472 = vmatmul.mubr.f32.gmra.mrb[0].mxu0 %v147
    %v473 = vpop.f32.mrb[0].mxu0
    %v474 = vadd.f32 0.0, %v473
    %v475 = vpop.f32.mrb[0].mxu0
    %v476 = vadd.f32 0.0, %v475
    %477 = vmatprep.mubr.f32.mxu0 0.0
    %478 = vmatmul.mubr.f32.gmra.mrb[0].mxu0 %v150
    %v479 = vpop.f32.mrb[0].mxu0
    %v480 = vadd.f32 0.0, %v479
    %v481 = vpop.f32.mrb[0].mxu0
    %v482 = vadd.f32 0.0, %v481
    %483 = vmatprep.mubr.f32.mxu0 0.0
    %484 = vmatmul.mubr.f32.gmra.mrb[0].mxu0 %v153
    %v485 = vpop.f32.mrb[0].mxu0
    %v486 = vadd.f32 0.0, %v485
    %v487 = vpop.f32.mrb[0].mxu0
    %v488 = vadd.f32 0.0, %v487
    %489 = vmatprep.mubr.f32.mxu0 0.0
    %490 = vmatmul.mubr.f32.gmra.mrb[0].mxu0 %v156
    %v491 = vpop.f32.mrb[0].mxu0
    %v492 = vadd.f32 0.0, %v491
    %v493 = vpop.f32.mrb[0].mxu0
    %v494 = vadd.f32 0.0, %v493
    %495 = vmatprep.mubr.f32.mxu0 0.0
    %496 = vmatmul.mubr.f32.gmra.mrb[0].mxu0 %v159
    %v497 = vpop.f32.mrb[0].mxu0
    %v498 = vadd.f32 0.0, %v497
    %v499 = vpop.f32.mrb[0].mxu0
    %v500 = vadd.f32 0.0, %v499
    %501 = vmatprep.mubr.f32.mxu0 0.0
    %502 = vmatmul.mubr.f32.gmra.mrb[0].mxu0 %v162
    %v503 = vpop.f32.mrb[0].mxu0
    %v504 = vadd.f32 0.0, %v503
    %v505 = vpop.f32.mrb[0].mxu0
    %v506 = vadd.f32 0.0, %v505
    %507 = vmatprep.mubr.f32.mxu0 0.0
    %508 = vmatmul.mubr.f32.gmra.mrb[0].mxu0 %v165
    %v509 = vpop.f32.mrb[0].mxu0
    %v510 = vadd.f32 0.0, %v509
    %v511 = vpop.f32.mrb[0].mxu0
    %v512 = vadd.f32 0.0, %v511
    %513 = vmatprep.mubr.f32.mxu0 0.0
    %514 = vmatmul.mubr.f32.gmra.mrb[0].mxu0 %v168
    %v515 = vpop.f32.mrb[0].mxu0
    %v516 = vadd.f32 0.0, %v515
    %v517 = vpop.f32.mrb[0].mxu0
    %v518 = vadd.f32 0.0, %v517
    %519 = vmatprep.mubr.f32.mxu0 0.0
    %520 = vmatmul.mubr.f32.gmra.mrb[0].mxu0 %v171
    %v521 = vpop.f32.mrb[0].mxu0
    %v522 = vadd.f32 0.0, %v521
    %v523 = vpop.f32.mrb[0].mxu0
    %v524 = vadd.f32 0.0, %v523
    %525 = vdwg.mxu0
    %526 = vst [vmem:[#allocation2] sm:$0xff] %v336
    %527 = vst [vmem:[#allocation2 + $0x8] sm:$0xff] %v338
    %528 = vst [vmem:[#allocation2 + $0x10] sm:$0xff] %v342
    %529 = vst [vmem:[#allocation2 + $0x18] sm:$0xff] %v344
    %530 = vst [vmem:[#allocation2 + $0x20] sm:$0xff] %v348
    %531 = vst [vmem:[#allocation2 + $0x28] sm:$0xff] %v350
    %532 = vst [vmem:[#allocation2 + $0x30] sm:$0xff] %v354
    %533 = vst [vmem:[#allocation2 + $0x38] sm:$0xff] %v356
    %534 = vst [vmem:[#allocation2 + $0x40] sm:$0xff] %v360
    %535 = vst [vmem:[#allocation2 + $0x48] sm:$0xff] %v362
    %536 = vst [vmem:[#allocation2 + $0x50] sm:$0xff] %v366
    %537 = vst [vmem:[#allocation2 + $0x58] sm:$0xff] %v368
    %538 = vst [vmem:[#allocation2 + $0x60] sm:$0xff] %v372
    %539 = vst [vmem:[#allocation2 + $0x68] sm:$0xff] %v374
    %540 = vst [vmem:[#allocation2 + $0x70] sm:$0xff] %v378
    %541 = vst [vmem:[#allocation2 + $0x78] sm:$0xff] %v380
    %542 = vst [vmem:[#allocation2 + $0x80] sm:$0xff] %v384
    %543 = vst [vmem:[#allocation2 + $0x88] sm:$0xff] %v386
    %544 = vst [vmem:[#allocation2 + $0x90] sm:$0xff] %v390
    %545 = vst [vmem:[#allocation2 + $0x98] sm:$0xff] %v392
    %546 = vst [vmem:[#allocation2 + $0xa0] sm:$0xff] %v396
    %547 = vst [vmem:[#allocation2 + $0xa8] sm:$0xff] %v398
    %548 = vst [vmem:[#allocation2 + $0xb0] sm:$0xff] %v402
    %549 = vst [vmem:[#allocation2 + $0xb8] sm:$0xff] %v404
    %550 = vst [vmem:[#allocation2 + $0xc0] sm:$0xff] %v408
    %551 = vst [vmem:[#allocation2 + $0xc8] sm:$0xff] %v410
    %552 = vst [vmem:[#allocation2 + $0xd0] sm:$0xff] %v414
    %553 = vst [vmem:[#allocation2 + $0xd8] sm:$0xff] %v416
    %554 = vst [vmem:[#allocation2 + $0xe0] sm:$0xff] %v420
    %555 = vst [vmem:[#allocation2 + $0xe8] sm:$0xff] %v422
    %556 = vst [vmem:[#allocation2 + $0xf0] sm:$0xff] %v426
    %557 = vst [vmem:[#allocation2 + $0xf8] sm:$0xff] %v428
    %558 = vst [vmem:[#allocation2 + $0x100] sm:$0xff] %v432
    %559 = vst [vmem:[#allocation2 + $0x108] sm:$0xff] %v434
    %560 = vst [vmem:[#allocation2 + $0x110] sm:$0xff] %v438
    %561 = vst [vmem:[#allocation2 + $0x118] sm:$0xff] %v440
    %562 = vst [vmem:[#allocation2 + $0x120] sm:$0xff] %v444
    %563 = vst [vmem:[#allocation2 + $0x128] sm:$0xff] %v446
    %564 = vst [vmem:[#allocation2 + $0x130] sm:$0xff] %v450
    %565 = vst [vmem:[#allocation2 + $0x138] sm:$0xff] %v452
    %566 = vst [vmem:[#allocation2 + $0x140] sm:$0xff] %v456
    %567 = vst [vmem:[#allocation2 + $0x148] sm:$0xff] %v458
    %568 = vst [vmem:[#allocation2 + $0x150] sm:$0xff] %v462
    %569 = vst [vmem:[#allocation2 + $0x158] sm:$0xff] %v464
    %570 = vst [vmem:[#allocation2 + $0x160] sm:$0xff] %v468
    %571 = vst [vmem:[#allocation2 + $0x168] sm:$0xff] %v470
    %572 = vst [vmem:[#allocation2 + $0x170] sm:$0xff] %v474
    %573 = vst [vmem:[#allocation2 + $0x178] sm:$0xff] %v476
    %574 = vst [vmem:[#allocation2 + $0x180] sm:$0xff] %v480
    %575 = vst [vmem:[#allocation2 + $0x188] sm:$0xff] %v482
    %576 = vst [vmem:[#allocation2 + $0x190] sm:$0xff] %v486
    %577 = vst [vmem:[#allocation2 + $0x198] sm:$0xff] %v488
    %578 = vst [vmem:[#allocation2 + $0x1a0] sm:$0xff] %v492
    %579 = vst [vmem:[#allocation2 + $0x1a8] sm:$0xff] %v494
    %580 = vst [vmem:[#allocation2 + $0x1b0] sm:$0xff] %v498
    %581 = vst [vmem:[#allocation2 + $0x1b8] sm:$0xff] %v500
    %582 = vst [vmem:[#allocation2 + $0x1c0] sm:$0xff] %v504
    %583 = vst [vmem:[#allocation2 + $0x1c8] sm:$0xff] %v506
    %584 = vst [vmem:[#allocation2 + $0x1d0] sm:$0xff] %v510
    %585 = vst [vmem:[#allocation2 + $0x1d8] sm:$0xff] %v512
    %586 = vst [vmem:[#allocation2 + $0x1e0] sm:$0xff] %v516
    %587 = vst [vmem:[#allocation2 + $0x1e8] sm:$0xff] %v518
    %588 = vst [vmem:[#allocation2 + $0x1f0] sm:$0xff] %v522
    %589 = vst [vmem:[#allocation2 + $0x1f8] sm:$0xff] %v524
    // Predicated region
    $region10: #{tpu_custom_call.1} parent=1 // pred_check
      _
    $region11: #{tpu_custom_call.1} parent=1 // pred_check_branch
      %591 = sbr.rel (0) target = $region13
    $region12: #{tpu_custom_call.1} parent=1 // pred_region
      %s593 = ssub.s32 8192, 8192
      %594 = vsyncadd [#allocation3], %s593
      %s595 = sshll.u32 [#allocation2], 4
      %s596 = int_to_ptr.vmem [resolvable:$true] %s595
      %601 = dma.vmem_to_hbm [thread:$0]  %s596, 8192, %s2, [#allocation3], 256, 256, 16
    $region13: #{tpu_custom_call.1} parent=1 // pred_fallthru
      _
    // Predicated region
    $region14: #{tpu_custom_call.1} parent=1 // pred_check
      _
    $region15: #{tpu_custom_call.1} parent=1 // pred_check_branch
      %603 = sbr.rel (0) target = $region17
    $region16: #{tpu_custom_call.1} parent=1 // pred_region
      %604 = dma.done [#allocation3], 8192
    $region17: #{tpu_custom_call.1} parent=1 // pred_fallthru
      _
    %605 = vsyncpa [#allocation3], 1

</llo_original>
